<compile_context>
chip_gen: v7x
topology: tpu7x:2x2x1
jax: 0.10.0
libtpu: 0.0.40
codegen_flags: <defaults>
</compile_context>

<pallas_src>
import functools
import math

import jax
import jax.numpy as jnp
from jax import lax
from jax.experimental import pallas as pl
from jax.experimental.pallas import tpu as pltpu

_TWO_PI = 2.0 * math.pi


def _mix32(x):
    """splitmix32-style avalanche finalizer; bijective on uint32."""
    x = x ^ (x >> jnp.uint32(16))
    x = x * jnp.uint32(0x7FEB352D)
    x = x ^ (x >> jnp.uint32(15))
    x = x * jnp.uint32(0x846CA68B)
    x = x ^ (x >> jnp.uint32(16))
    return x


def _bits_to_unit(b):
    """uint32 bits -> float32 uniform in [0, 1) via the mantissa trick."""
    f = lax.bitcast_convert_type(
        (b >> jnp.uint32(9)) | jnp.uint32(0x3F800000), jnp.float32)
    return f - jnp.float32(1.0)


def _normal_pair(ctr, smix):
    """Two N(0,1) draws per unique counter (both Box-Muller branches).

    Note: uniforms use 23 mantissa bits and u1 is bounded away from 0 by the
    representation itself, so |z| is truncated at ~5.65 (fine for noise).
    """
    c = ctr * jnp.uint32(2)
    b1 = _mix32(c ^ smix)
    b2 = _mix32((c + jnp.uint32(1)) ^ smix)
    u1 = jnp.float32(1.0) - _bits_to_unit(b1)   # (0, 1]: log-safe
    u2 = _bits_to_unit(b2)                      # [0, 1)
    r = jnp.sqrt(jnp.float32(-2.0) * jnp.log(u1))
    theta = jnp.float32(_TWO_PI) * u2
    return r * jnp.cos(theta), r * jnp.sin(theta)


def _gaussian_noise_kernel(seed_ref, x_ref, o_ref, *, sigma, gridded):
    tr, lanes = x_ref.shape
    # Global row offset of this block -> globally unique per-element counters,
    # so every grid tile / TensorCore draws distinct noise for the same seed.
    row_off = pl.program_id(0) * tr if gridded else 0

    smix = _mix32(seed_ref[0])
    sig = jnp.float32(sigma)
    one = jnp.float32(1.0)

    def counters(shape):
        rid = lax.broadcasted_iota(jnp.int32, shape, 0) + row_off
        lid = lax.broadcasted_iota(jnp.int32, shape, 1)
        return rid.astype(jnp.uint32) * jnp.uint32(lanes) + lid.astype(jnp.uint32)

    if tr % 2 == 0:
        # Use both Box-Muller branches: one (u1,u2) pair -> two normals, applied
        # to row i (cos branch) and row i + tr/2 (sin branch). Halves the hash
        # work and the log/sqrt count vs. one branch per element.
        h = tr // 2
        z_a, z_b = _normal_pair(counters((h, lanes)), smix)
        xa = x_ref[0:h, :].astype(jnp.float32)
        xb = x_ref[h:tr, :].astype(jnp.float32)
        o_ref[0:h, :] = (xa * (one + sig * z_a)).astype(o_ref.dtype)
        o_ref[h:tr, :] = (xb * (one + sig * z_b)).astype(o_ref.dtype)
    else:
        z, _ = _normal_pair(counters((tr, lanes)), smix)
        x = x_ref[...].astype(jnp.float32)
        o_ref[...] = (x * (one + sig * z)).astype(o_ref.dtype)


def gaussian_noise(x, seed, *, sigma=1.0, training=True,
                   is_relative_detach=True, block_rows=512):
    """Pallas implementation of GaussianNoise.forward (forward values only)."""
    # TODO(synk): is_relative_detach only changes the autodiff graph (detach);
    # the forward values are identical, so it is a no-op here.
    if (not training) or sigma == 0:
        return x

    orig_shape = x.shape
    orig_dtype = x.dtype
    total = math.prod(orig_shape)
    rows = pl.cdiv(total, 128)
    pad = rows * 128 - total

    flat = x.reshape(-1)
    if pad:
        flat = jnp.pad(flat, (0, pad))
    x2 = flat.reshape(rows, 128)  # lane-dense slab, native dtype (cast in-kernel)

    seed_arr = jnp.asarray([int(seed) & 0xFFFFFFFF], dtype=jnp.uint32)
    smem_spec = pl.BlockSpec(memory_space=pltpu.MemorySpace.SMEM)

    if rows <= block_rows:
        # Small / overhead-bound case: single whole-array block, no grid
        # (no degenerate 1-step pipeline scaffolding).
        out = pl.pallas_call(
            functools.partial(_gaussian_noise_kernel,
                              sigma=float(sigma), gridded=False),
            out_shape=jax.ShapeDtypeStruct((rows, 128), orig_dtype),
            in_specs=[smem_spec,
                      pl.BlockSpec(memory_space=pltpu.MemorySpace.VMEM)],
            out_specs=pl.BlockSpec(memory_space=pltpu.MemorySpace.VMEM),
        )(seed_arr, x2)
    else:
        # Large case: row-tiled, auto-pipelined, megacore-shardable.
        assert block_rows % 2 == 0
        grid = (pl.cdiv(rows, block_rows),)
        out = pl.pallas_call(
            functools.partial(_gaussian_noise_kernel,
                              sigma=float(sigma), gridded=True),
            out_shape=jax.ShapeDtypeStruct((rows, 128), orig_dtype),
            grid=grid,
            in_specs=[smem_spec,
                      pl.BlockSpec((block_rows, 128), lambda i: (i, 0))],
            out_specs=pl.BlockSpec((block_rows, 128), lambda i: (i, 0)),
            compiler_params=pltpu.CompilerParams(
                dimension_semantics=("parallel",)),
        )(seed_arr, x2)

    out_flat = out.reshape(-1)
    if pad:
        out_flat = out_flat[:total]
    return out_flat.reshape(orig_shape)


if __name__ == "__main__":
    key = jax.random.PRNGKey(0)
    # NCHW, matching the PyTorch convention: batch=2, channels=4, spatial=16.
    x = jax.random.normal(key, (2, 4, 16, 16), dtype=jnp.float32)

    out = jax.block_until_ready(
        gaussian_noise(x, seed=1234, sigma=1.0, training=True,
                       is_relative_detach=True))

    # Shape/dtype preserved, finite, and noise actually applied.
    assert out.shape == x.shape and out.dtype == x.dtype
    assert bool(jnp.all(jnp.isfinite(out)))
    assert bool(jnp.any(out != x))

    # Relative noise: zero input stays exactly zero.
    out_zero = jax.block_until_ready(
        gaussian_noise(jnp.zeros_like(x), seed=7, sigma=1.0))
    assert bool(jnp.all(out_zero == 0))

    # Implied z = out/x - 1 should look like a standard normal (sigma=1).
    z = out / x - 1.0
    assert abs(float(jnp.mean(z))) < 0.12
    assert 0.85 < float(jnp.std(z)) < 1.15

    # Exercise the tiled / gridded path on a slightly larger (still small) slab:
    # (2,4,32,32) -> 64 rows, block_rows=16 -> grid of 4 tiles.
    x_big = jax.random.normal(jax.random.PRNGKey(1), (2, 4, 32, 32),
                              dtype=jnp.float32)
    out_big = jax.block_until_ready(
        gaussian_noise(x_big, seed=99, sigma=0.5, block_rows=16))
    assert out_big.shape == x_big.shape
    assert bool(jnp.all(jnp.isfinite(out_big)))
    zb = (out_big / x_big - 1.0) / 0.5
    assert abs(float(jnp.mean(zb))) < 0.12
    assert 0.85 < float(jnp.std(zb)) < 1.15

    # Eval mode / sigma == 0 are exact identities (no kernel launch).
    assert bool(jnp.all(gaussian_noise(x, seed=1, training=False) == x))
    assert bool(jnp.all(gaussian_noise(x, seed=1, sigma=0.0) == x))

    print("KERNEL_OK")
</pallas_src>

<mosaic_0001>
module attributes {stable_mosaic.version = 11 : i64} {
  func.func @_gaussian_noise_kernel(%arg0: memref<1xi32, #tpu.memory_space<smem>>, %arg1: memref<16x128xf32, #tpu.memory_space<vmem>>, %arg2: memref<16x128xf32, #tpu.memory_space<vmem>>) attributes {dimension_semantics = [], scalar_prefetch = 0 : i64, scratch_operands = 0 : i64, tpu.core_type = #tpu.core_type<tc>} {
    %c0 = arith.constant 0 : index
    %0 = memref.load %arg0[%c0] : memref<1xi32, #tpu.memory_space<smem>>
    %c16_i32 = arith.constant 16 : i32
    %1 = arith.shrui %0, %c16_i32 : i32
    %2 = arith.xori %0, %1 : i32
    %c2146121005_i32 = arith.constant 2146121005 : i32
    %3 = arith.muli %2, %c2146121005_i32 : i32
    %c15_i32 = arith.constant 15 : i32
    %4 = arith.shrui %3, %c15_i32 : i32
    %5 = arith.xori %3, %4 : i32
    %c-2073254261_i32 = arith.constant -2073254261 : i32
    %6 = arith.muli %5, %c-2073254261_i32 : i32
    %c16_i32_0 = arith.constant 16 : i32
    %7 = arith.shrui %6, %c16_i32_0 : i32
    %8 = arith.xori %6, %7 : i32
    %9 = tpu.iota {dimensions = array<i32: 0>} : vector<8x128xi32>
    %c0_i32 = arith.constant 0 : i32
    %10 = vector.broadcast %c0_i32 : i32 to vector<8x128xi32>
    %11 = arith.addi %9, %10 : vector<8x128xi32>
    %12 = tpu.iota {dimensions = array<i32: 1>} : vector<8x128xi32>
    %c128_i32 = arith.constant 128 : i32
    %13 = vector.broadcast %c128_i32 : i32 to vector<8x128xi32>
    %14 = arith.muli %11, %13 : vector<8x128xi32>
    %15 = arith.addi %14, %12 : vector<8x128xi32>
    %c2_i32 = arith.constant 2 : i32
    %16 = vector.broadcast %c2_i32 : i32 to vector<8x128xi32>
    %17 = arith.muli %15, %16 : vector<8x128xi32>
    %18 = vector.broadcast %8 : i32 to vector<8x128xi32>
    %19 = arith.xori %17, %18 : vector<8x128xi32>
    %c16_i32_1 = arith.constant 16 : i32
    %20 = vector.broadcast %c16_i32_1 : i32 to vector<8x128xi32>
    %21 = arith.shrui %19, %20 : vector<8x128xi32>
    %22 = arith.xori %19, %21 : vector<8x128xi32>
    %c2146121005_i32_2 = arith.constant 2146121005 : i32
    %23 = vector.broadcast %c2146121005_i32_2 : i32 to vector<8x128xi32>
    %24 = arith.muli %22, %23 : vector<8x128xi32>
    %c15_i32_3 = arith.constant 15 : i32
    %25 = vector.broadcast %c15_i32_3 : i32 to vector<8x128xi32>
    %26 = arith.shrui %24, %25 : vector<8x128xi32>
    %27 = arith.xori %24, %26 : vector<8x128xi32>
    %c-2073254261_i32_4 = arith.constant -2073254261 : i32
    %28 = vector.broadcast %c-2073254261_i32_4 : i32 to vector<8x128xi32>
    %29 = arith.muli %27, %28 : vector<8x128xi32>
    %c16_i32_5 = arith.constant 16 : i32
    %30 = vector.broadcast %c16_i32_5 : i32 to vector<8x128xi32>
    %31 = arith.shrui %29, %30 : vector<8x128xi32>
    %32 = arith.xori %29, %31 : vector<8x128xi32>
    %c1_i32 = arith.constant 1 : i32
    %33 = vector.broadcast %c1_i32 : i32 to vector<8x128xi32>
    %34 = arith.addi %17, %33 : vector<8x128xi32>
    %35 = vector.broadcast %8 : i32 to vector<8x128xi32>
    %36 = arith.xori %34, %35 : vector<8x128xi32>
    %c16_i32_6 = arith.constant 16 : i32
    %37 = vector.broadcast %c16_i32_6 : i32 to vector<8x128xi32>
    %38 = arith.shrui %36, %37 : vector<8x128xi32>
    %39 = arith.xori %36, %38 : vector<8x128xi32>
    %c2146121005_i32_7 = arith.constant 2146121005 : i32
    %40 = vector.broadcast %c2146121005_i32_7 : i32 to vector<8x128xi32>
    %41 = arith.muli %39, %40 : vector<8x128xi32>
    %c15_i32_8 = arith.constant 15 : i32
    %42 = vector.broadcast %c15_i32_8 : i32 to vector<8x128xi32>
    %43 = arith.shrui %41, %42 : vector<8x128xi32>
    %44 = arith.xori %41, %43 : vector<8x128xi32>
    %c-2073254261_i32_9 = arith.constant -2073254261 : i32
    %45 = vector.broadcast %c-2073254261_i32_9 : i32 to vector<8x128xi32>
    %46 = arith.muli %44, %45 : vector<8x128xi32>
    %c16_i32_10 = arith.constant 16 : i32
    %47 = vector.broadcast %c16_i32_10 : i32 to vector<8x128xi32>
    %48 = arith.shrui %46, %47 : vector<8x128xi32>
    %49 = arith.xori %46, %48 : vector<8x128xi32>
    %c9_i32 = arith.constant 9 : i32
    %50 = vector.broadcast %c9_i32 : i32 to vector<8x128xi32>
    %51 = arith.shrui %32, %50 : vector<8x128xi32>
    %c1065353216_i32 = arith.constant 1065353216 : i32
    %52 = vector.broadcast %c1065353216_i32 : i32 to vector<8x128xi32>
    %53 = arith.ori %51, %52 : vector<8x128xi32>
    %54 = tpu.bitcast %53 : vector<8x128xi32> -> vector<8x128xf32>
    %cst = arith.constant 1.000000e+00 : f32
    %55 = vector.broadcast %cst : f32 to vector<8x128xf32>
    %56 = arith.subf %54, %55 : vector<8x128xf32>
    %cst_11 = arith.constant 1.000000e+00 : f32
    %57 = vector.broadcast %cst_11 : f32 to vector<8x128xf32>
    %58 = arith.subf %57, %56 : vector<8x128xf32>
    %c9_i32_12 = arith.constant 9 : i32
    %59 = vector.broadcast %c9_i32_12 : i32 to vector<8x128xi32>
    %60 = arith.shrui %49, %59 : vector<8x128xi32>
    %c1065353216_i32_13 = arith.constant 1065353216 : i32
    %61 = vector.broadcast %c1065353216_i32_13 : i32 to vector<8x128xi32>
    %62 = arith.ori %60, %61 : vector<8x128xi32>
    %63 = tpu.bitcast %62 : vector<8x128xi32> -> vector<8x128xf32>
    %cst_14 = arith.constant 1.000000e+00 : f32
    %64 = vector.broadcast %cst_14 : f32 to vector<8x128xf32>
    %65 = arith.subf %63, %64 : vector<8x128xf32>
    %66 = math.log %58 : vector<8x128xf32>
    %cst_15 = arith.constant -2.000000e+00 : f32
    %67 = vector.broadcast %cst_15 : f32 to vector<8x128xf32>
    %68 = arith.mulf %67, %66 : vector<8x128xf32>
    %69 = math.sqrt %68 : vector<8x128xf32>
    %cst_16 = arith.constant 6.28318548 : f32
    %70 = vector.broadcast %cst_16 : f32 to vector<8x128xf32>
    %71 = arith.mulf %70, %65 : vector<8x128xf32>
    %72 = math.cos %71 : vector<8x128xf32>
    %73 = arith.mulf %69, %72 : vector<8x128xf32>
    %74 = math.sin %71 : vector<8x128xf32>
    %75 = arith.mulf %69, %74 : vector<8x128xf32>
    %c0_17 = arith.constant 0 : index
    %c0_18 = arith.constant 0 : index
    %76 = vector.load %arg1[%c0_17, %c0_18] : memref<16x128xf32, #tpu.memory_space<vmem>>, vector<8x128xf32>
    %c8 = arith.constant 8 : index
    %c0_19 = arith.constant 0 : index
    %77 = vector.load %arg1[%c8, %c0_19] : memref<16x128xf32, #tpu.memory_space<vmem>>, vector<8x128xf32>
    %cst_20 = arith.constant 1.000000e+00 : f32
    %78 = vector.broadcast %cst_20 : f32 to vector<8x128xf32>
    %79 = arith.mulf %78, %73 : vector<8x128xf32>
    %cst_21 = arith.constant 1.000000e+00 : f32
    %80 = vector.broadcast %cst_21 : f32 to vector<8x128xf32>
    %81 = arith.addf %80, %79 : vector<8x128xf32>
    %82 = arith.mulf %76, %81 : vector<8x128xf32>
    %c0_22 = arith.constant 0 : index
    %c0_23 = arith.constant 0 : index
    %83 = vector.load %arg2[%c0_22, %c0_23] : memref<16x128xf32, #tpu.memory_space<vmem>>, vector<8x128xf32>
    tpu.vector_store %arg2[%c0_22, %c0_23], %82 {strides = array<i32>} : memref<16x128xf32, #tpu.memory_space<vmem>>, vector<8x128xf32>,
    %cst_24 = arith.constant 1.000000e+00 : f32
    %84 = vector.broadcast %cst_24 : f32 to vector<8x128xf32>
    %85 = arith.mulf %84, %75 : vector<8x128xf32>
    %cst_25 = arith.constant 1.000000e+00 : f32
    %86 = vector.broadcast %cst_25 : f32 to vector<8x128xf32>
    %87 = arith.addf %86, %85 : vector<8x128xf32>
    %88 = arith.mulf %77, %87 : vector<8x128xf32>
    %c8_26 = arith.constant 8 : index
    %c0_27 = arith.constant 0 : index
    %89 = vector.load %arg2[%c8_26, %c0_27] : memref<16x128xf32, #tpu.memory_space<vmem>>, vector<8x128xf32>
    tpu.vector_store %arg2[%c8_26, %c0_27], %88 {strides = array<i32>} : memref<16x128xf32, #tpu.memory_space<vmem>>, vector<8x128xf32>,
    return
  }
}

</mosaic_0001>

<llo_original>
// kernel: tpu_custom_call.1
$region0: #{tpu_custom_call.1}
  #allocation0 [shape = 'u32[]', space=smem, size = 0x4, offset = 0x4, fixed_abs, tag = 'smem constant byte address 0x4 - core index']
  #allocation1 [shape = 'u32[144,128]{1,0:T(1,128)}', space=vmem, size = 0x12000, scoped, tag = 'internal scratch']
  #allocation2 [shape = 'u32[1]{0:T(128)S(6)}', space=smem, size = 0x200, scoped, tag = 'scoped memory for tpu_custom_call.1']
  %s0 = inlined_call_operand.<no memory space> [shape: u32[1], index: 0, kind: input, shape index: {}]
  %s1 = inlined_call_operand.hbm [shape: f32[16,128], index: 1, kind: input, shape index: {}]
  %s2 = inlined_call_operand.hbm [shape: f32[16,128], index: 2, kind: output, shape index: {}]
  %s3 = sld [smem:[#allocation0]]
  $region22: #{tpu_custom_call.1} parent=0
    _
  %s5 = ssub.s32 1, %s3
  %s6 = scalar_select 0, %s5, %s3
  %7 = sst [smem:[#allocation2]] %s0
  $region1: #{tpu_custom_call.1} parent=0
    #allocation3 [shape = 'u8[8192]{0}', space=vmem, size = 0x2000, scoped, tag = 'input window, operand 1, single buffered']
    #allocation4 [shape = 's32[1]{0}', space=sflag, size = 0x4, scoped, tag = 'scoped memory for tpu_custom_call.1']
    #allocation5 [shape = 's32[1]{0}', space=sflag, size = 0x4, scoped, tag = 'scoped memory for tpu_custom_call.1']
    #allocation6 [shape = 'u8[8192]{0}', space=vmem, size = 0x2000, scoped, tag = 'output window, operand 0, single buffered']
    %8 = vsyncpa [#allocation4], 0
    %9 = vsyncpa [#allocation5], 0
    // Predicated region
    $region2: #{tpu_custom_call.1} parent=1 // pred_check
      _
    $region3: #{tpu_custom_call.1} parent=1 // pred_check_branch
      %11 = sbr.rel (0) target = $region5
    $region4: #{tpu_custom_call.1} parent=1 // pred_region
      _
    $region5: #{tpu_custom_call.1} parent=1 // pred_fallthru
      _
    // Predicated region
    $region6: #{tpu_custom_call.1} parent=1 // pred_check
      _
    $region7: #{tpu_custom_call.1} parent=1 // pred_check_branch
      %13 = sbr.rel (0) target = $region9
    $region8: #{tpu_custom_call.1} parent=1 // pred_region
      %s15 = ssub.s32 256, 256
      %16 = vsyncadd [#allocation4], %s15
      %s17 = sshll.u32 [#allocation3], 4
      %s18 = int_to_ptr.vmem [resolvable:$true] %s17
      %23 = dma.hbm_to_vmem [thread:$0]  %s1, 256, %s18, [#allocation4], 128, 128, 8
    $region9: #{tpu_custom_call.1} parent=1 // pred_fallthru
      _
    // Predicated region
    $region10: #{tpu_custom_call.1} parent=1 // pred_check
      _
    $region11: #{tpu_custom_call.1} parent=1 // pred_check_branch
      %25 = sbr.rel (0) target = $region13
    $region12: #{tpu_custom_call.1} parent=1 // pred_region
      %26 = dma.done [#allocation4], 256
    $region13: #{tpu_custom_call.1} parent=1 // pred_fallthru
      _
    %s27 = sld [smem:[#allocation2]]
    %s28 = sshrl.u32 %s27, 16
    %s29 = sxor.u32 %s27, %s28
    %s30 = smul.u32 %s29, 2146121005
    %s31 = sshrl.u32 %s30, 15
    %s32 = sxor.u32 %s30, %s31
    %s33 = smul.u32 %s32, 2221713035
    %s34 = sshrl.u32 %s33, 16
    %s35 = sxor.u32 %s33, %s34
    %v36 = vlaneseq
    %v37 = vshrl.u32 %v36, 7
    %v38 = vlaneseq
    %v39 = vand.u32 %v38, 127
    %v40 = vmul.u32 %v37, 128
    %v41 = vadd.s32 %v40, %v39
    %v42 = vmul.u32 %v41, 2
    %v43 = vstv %s35
    %v44 = vxor.u32 %v42, %v43
    %v45 = vshrl.u32 %v44, 16
    %v46 = vxor.u32 %v44, %v45
    %v47 = vmul.u32 %v46, 2146121005
    %v48 = vshrl.u32 %v47, 15
    %v49 = vxor.u32 %v47, %v48
    %v50 = vmul.u32 %v49, 2221713035
    %v51 = vshrl.u32 %v50, 16
    %v52 = vxor.u32 %v50, %v51
    %v53 = vadd.s32 %v42, 1
    %v54 = vxor.u32 %v53, %v43
    %v55 = vshrl.u32 %v54, 16
    %v56 = vxor.u32 %v54, %v55
    %v57 = vmul.u32 %v56, 2146121005
    %v58 = vshrl.u32 %v57, 15
    %v59 = vxor.u32 %v57, %v58
    %v60 = vmul.u32 %v59, 2221713035
    %v61 = vshrl.u32 %v60, 16
    %v62 = vxor.u32 %v60, %v61
    %v63 = vshrl.u32 %v52, 9
    %v64 = vor.u32 %v63, 1065353216
    %v66 = vsub.f32 %v64, 1.0
    %v67 = vsub.f32 1.0, %v66
    %v68 = vshrl.u32 %v62, 9
    %v69 = vor.u32 %v68, 1065353216
    %v71 = vsub.f32 %v69, 1.0
    %v72 = vlog2.pop %v67
    %v73 = vmul.f32 %v72, 0.6931472
    %v74 = vmul.f32 %v73, -2.0
    %v75 = vrsqrt.pop %v74
    %v76 = vmul.f32 %v74, %v75
    %vm77 = vcmp.eq.f32.partialorder %v74, inf
    %v78 = vsel %vm77, %v74, %v76
    %vm79 = vcmp.eq.f32.partialorder %v74, 0.0
    %v80 = vand.u32 %v74, 2147483648
    %v81 = vsel %vm79, %v80, %v78
    %v82 = vmul.f32 %v71, 6.2831855
    %v83 = vand.u32 2147483647, %v82
    %vm84 = vcmp.le.f32.partialorder %v83, 0.7853982
    %vm85 = vcmp.lt.s32.totalorder %v82, 0
    %v86 = vand.u32 %v82, 2139095040
    %v87 = vshrl.u32 %v86, 23
    %v88 = vsub.s32 %v87, 127
    %v89 = vand.u32 2147483647, %v82
    %v90 = vand.u32 %v89, 8388607
    %v91 = vor.u32 %v90, 8388608
    %v92 = vsub.s32 0, %v91
    %v93 = vadd.s32 %v88, 1
    %vm94 = vcmp.gt.s32.totalorder %v93, 0
    %v95 = vsel %vm94, %v93, 0
    %v96 = vshrl.u32 %v95, 5
    %v97 = vand.u32 %v95, 31
    %v98 = vsub.s32 32, %v97
    %v99 = vshrl.u32 683565275, %v98
    %v100 = vshll.u32 683565275, %v97
    %v101 = vshrl.u32 2475754826, %v98
    %v102 = vor.u32 %v100, %v101
    %v103 = vshll.u32 2475754826, %v97
    %v104 = vshrl.u32 2131351028, %v98
    %v105 = vor.u32 %v103, %v104
    %v106 = vshll.u32 2131351028, %v97
    %v107 = vshrl.u32 2102212464, %v98
    %v108 = vor.u32 %v106, %v107
    %v109 = vshll.u32 2102212464, %v97
    %v110 = vshrl.u32 920167782, %v98
    %v111 = vor.u32 %v109, %v110
    %v112 = vshll.u32 920167782, %v97
    %v113 = vshrl.u32 1326507024, %v98
    %v114 = vor.u32 %v112, %v113
    %vm115 = vcmp.lt.s32.totalorder %v96, 1
    %vm116 = vcmp.lt.s32.totalorder %v96, 2
    %vm117 = vcmp.lt.s32.totalorder %v96, 3
    %vm118 = vcmp.lt.s32.totalorder %v96, 4
    %v119 = vsel %vm115, %v99, %v102
    %v120 = vsel %vm118, %v108, 2102212464
    %v121 = vsel %vm117, %v105, %v120
    %v122 = vsel %vm116, %v119, %v121
    %v123 = vsel %vm115, %v102, %v105
    %v124 = vsel %vm118, %v111, 920167782
    %v125 = vsel %vm117, %v108, %v124
    %v126 = vsel %vm116, %v123, %v125
    %v127 = vsel %vm115, %v105, %v108
    %v128 = vsel %vm118, %v114, 1326507024
    %v129 = vsel %vm117, %v111, %v128
    %v130 = vsel %vm116, %v127, %v129
    %v131 = vshll.u32 %v91, 8
    %v132 = vmul.u32.u64.compose %v131, %v130
    %v133 = vextract.low.u32 %v132
    %v134 = vextract.high.u32 %v132
    %v135 = vmul.u32.u64.compose %v131, %v126
    %v136 = vextract.low.u32 %v135
    %v137 = vextract.high.u32 %v135
    %v138 = vmul.u32 %v131, %v122
    %v139 = vadd.s32 %v134, %v136
    %vm140 = vc.u32 %v134, %v136
    %v141 = vadd.s32 %v137, 1
    %v142 = vsel %vm140, %v141, %v137
    %v143 = vadd.s32 %v138, %v142
    %v144 = vadd.s32 %v143, 536870912
    %v145 = vshrl.u32 %v144, 30
    %v146 = vshll.u32 %v145, 30
    %v147 = vsub.s32 %v143, %v146
    %vm148 = vcmp.lt.s32.totalorder %v147, 0
    %v149 = vsub.s32 0, %v147
    %v150 = vsel %vm148, %v149, %v147
    %v151 = vclz %v150
    %v152 = vsub.s32 %v151, 2
    %vm153 = vcmp.gt.s32.totalorder 0, %v152
    %v154 = vsel %vm153, 0, %v152
    %v155 = vsub.s32 32, %v154
    %v156 = vshll.u32 %v147, %v154
    %v157 = vshrl.u32 %v139, %v155
    %v158 = vor.u32 %v156, %v157
    %v159 = vsub.s32 4294967266, %v154
    %v160 = vadd.s32 %v159, 127
    %v161 = vshll.u32 %v160, 23
    %v162 = vor.u32 4788187, %v161
    %v163 = vand.u32 2147483647, %v162
    %v165 = vcvt.s32.f32 %v158
    %v166 = vmul.f32 %v165, %v163
    %v167 = vxor.u32 %v166, 2147483648
    %v168 = vsel %vm85, %v167, %v166
    %v169 = vsub.s32 4, %v145
    %v170 = vsel %vm85, %v169, %v145
    %v171 = vsel %vm84, %v82, %v168
    %v172 = vsel %vm84, 0, %v170
    %v173 = vcosq.f32.pop %v171
    %v174 = vsinq.f32.pop %v171
    %vm175 = vweird.f32 %v82
    %v176 = vand.u32 %v172, 3
    %vm177 = vcmp.lt.s32.totalorder %v176, 2
    %vm178 = vcmp.eq.s32.totalorder %v176, 0
    %v179 = vxor.u32 %v174, 2147483648
    %v180 = vsel %vm178, %v173, %v179
    %vm181 = vcmp.eq.s32.totalorder %v176, 2
    %v182 = vxor.u32 %v173, 2147483648
    %v183 = vsel %vm181, %v182, %v174
    %v184 = vsel %vm177, %v180, %v183
    %v185 = vsel %vm175, nan, %v184
    %v186 = vmul.f32 %v81, %v185
    %v187 = vand.u32 2147483647, %v82
    %vm188 = vcmp.le.f32.partialorder %v187, 0.7853982
    %vm189 = vcmp.lt.s32.totalorder %v82, 0
    %v190 = vand.u32 %v82, 2139095040
    %v191 = vshrl.u32 %v190, 23
    %v192 = vsub.s32 %v191, 127
    %v193 = vand.u32 2147483647, %v82
    %v194 = vand.u32 %v193, 8388607
    %v195 = vor.u32 %v194, 8388608
    %v196 = vsub.s32 0, %v195
    %v197 = vadd.s32 %v192, 1
    %vm198 = vcmp.gt.s32.totalorder %v197, 0
    %v199 = vsel %vm198, %v197, 0
    %v200 = vshrl.u32 %v199, 5
    %v201 = vand.u32 %v199, 31
    %v202 = vsub.s32 32, %v201
    %v203 = vshrl.u32 683565275, %v202
    %v204 = vshll.u32 683565275, %v201
    %v205 = vshrl.u32 2475754826, %v202
    %v206 = vor.u32 %v204, %v205
    %v207 = vshll.u32 2475754826, %v201
    %v208 = vshrl.u32 2131351028, %v202
    %v209 = vor.u32 %v207, %v208
    %v210 = vshll.u32 2131351028, %v201
    %v211 = vshrl.u32 2102212464, %v202
    %v212 = vor.u32 %v210, %v211
    %v213 = vshll.u32 2102212464, %v201
    %v214 = vshrl.u32 920167782, %v202
    %v215 = vor.u32 %v213, %v214
    %v216 = vshll.u32 920167782, %v201
    %v217 = vshrl.u32 1326507024, %v202
    %v218 = vor.u32 %v216, %v217
    %vm219 = vcmp.lt.s32.totalorder %v200, 1
    %vm220 = vcmp.lt.s32.totalorder %v200, 2
    %vm221 = vcmp.lt.s32.totalorder %v200, 3
    %vm222 = vcmp.lt.s32.totalorder %v200, 4
    %v223 = vsel %vm219, %v203, %v206
    %v224 = vsel %vm222, %v212, 2102212464
    %v225 = vsel %vm221, %v209, %v224
    %v226 = vsel %vm220, %v223, %v225
    %v227 = vsel %vm219, %v206, %v209
    %v228 = vsel %vm222, %v215, 920167782
    %v229 = vsel %vm221, %v212, %v228
    %v230 = vsel %vm220, %v227, %v229
    %v231 = vsel %vm219, %v209, %v212
    %v232 = vsel %vm222, %v218, 1326507024
    %v233 = vsel %vm221, %v215, %v232
    %v234 = vsel %vm220, %v231, %v233
    %v235 = vshll.u32 %v195, 8
    %v236 = vmul.u32.u64.compose %v235, %v234
    %v237 = vextract.low.u32 %v236
    %v238 = vextract.high.u32 %v236
    %v239 = vmul.u32.u64.compose %v235, %v230
    %v240 = vextract.low.u32 %v239
    %v241 = vextract.high.u32 %v239
    %v242 = vmul.u32 %v235, %v226
    %v243 = vadd.s32 %v238, %v240
    %vm244 = vc.u32 %v238, %v240
    %v245 = vadd.s32 %v241, 1
    %v246 = vsel %vm244, %v245, %v241
    %v247 = vadd.s32 %v242, %v246
    %v248 = vadd.s32 %v247, 536870912
    %v249 = vshrl.u32 %v248, 30
    %v250 = vshll.u32 %v249, 30
    %v251 = vsub.s32 %v247, %v250
    %vm252 = vcmp.lt.s32.totalorder %v251, 0
    %v253 = vsub.s32 0, %v251
    %v254 = vsel %vm252, %v253, %v251
    %v255 = vclz %v254
    %v256 = vsub.s32 %v255, 2
    %vm257 = vcmp.gt.s32.totalorder 0, %v256
    %v258 = vsel %vm257, 0, %v256
    %v259 = vsub.s32 32, %v258
    %v260 = vshll.u32 %v251, %v258
    %v261 = vshrl.u32 %v243, %v259
    %v262 = vor.u32 %v260, %v261
    %v263 = vsub.s32 4294967266, %v258
    %v264 = vadd.s32 %v263, 127
    %v265 = vshll.u32 %v264, 23
    %v266 = vor.u32 4788187, %v265
    %v267 = vand.u32 2147483647, %v266
    %v269 = vcvt.s32.f32 %v262
    %v270 = vmul.f32 %v269, %v267
    %v271 = vxor.u32 %v270, 2147483648
    %v272 = vsel %vm189, %v271, %v270
    %v273 = vsub.s32 4, %v249
    %v274 = vsel %vm189, %v273, %v249
    %v275 = vsel %vm188, %v82, %v272
    %v276 = vsel %vm188, 0, %v274
    %v277 = vcosq.f32.pop %v275
    %v278 = vsinq.f32.pop %v275
    %vm279 = vweird.f32 %v82
    %v280 = vadd.s32 %v276, 3
    %v281 = vand.u32 %v280, 3
    %vm282 = vcmp.lt.s32.totalorder %v281, 2
    %vm283 = vcmp.eq.s32.totalorder %v281, 0
    %v284 = vxor.u32 %v278, 2147483648
    %v285 = vsel %vm283, %v277, %v284
    %vm286 = vcmp.eq.s32.totalorder %v281, 2
    %v287 = vxor.u32 %v277, 2147483648
    %v288 = vsel %vm286, %v287, %v278
    %v289 = vsel %vm282, %v285, %v288
    %v290 = vsel %vm279, nan, %v289
    %v291 = vmul.f32 %v81, %v290
    %v292 = vld [vmem:[#allocation3] sm:$0xff]
    %v293 = vld [vmem:[#allocation3 + $0x8] sm:$0xff]
    %v294 = vadd.f32 %v186, 1.0
    %v295 = vmul.f32 %v292, %v294
    %296 = vst [vmem:[#allocation6] sm:$0xff] %v295
    %v297 = vadd.f32 %v291, 1.0
    %v298 = vmul.f32 %v293, %v297
    %299 = vst [vmem:[#allocation6 + $0x8] sm:$0xff] %v298
    // Predicated region
    $region14: #{tpu_custom_call.1} parent=1 // pred_check
      _
    $region15: #{tpu_custom_call.1} parent=1 // pred_check_branch
      %301 = sbr.rel (0) target = $region17
    $region16: #{tpu_custom_call.1} parent=1 // pred_region
      %s303 = ssub.s32 256, 256
      %304 = vsyncadd [#allocation5], %s303
      %s305 = sshll.u32 [#allocation6], 4
      %s306 = int_to_ptr.vmem [resolvable:$true] %s305
      %311 = dma.vmem_to_hbm [thread:$0]  %s306, 256, %s2, [#allocation5], 128, 128, 8
    $region17: #{tpu_custom_call.1} parent=1 // pred_fallthru
      _
    // Predicated region
    $region18: #{tpu_custom_call.1} parent=1 // pred_check
      _
    $region19: #{tpu_custom_call.1} parent=1 // pred_check_branch
      %313 = sbr.rel (0) target = $region21
    $region20: #{tpu_custom_call.1} parent=1 // pred_region
      %314 = dma.done [#allocation5], 256
    $region21: #{tpu_custom_call.1} parent=1 // pred_fallthru
      _
    %315 = vsyncpa [#allocation4], 1
    %316 = vsyncpa [#allocation5], 1

</llo_original>
